<compile_context>
chip_gen: v7x
topology: tpu7x:2x2x1
jax: 0.10.0
libtpu: 0.0.40
codegen_flags: <defaults>
</compile_context>

<pallas_src>
import functools

import jax
import jax.numpy as jnp
from jax.experimental import pallas as pl
from jax.experimental.pallas import tpu as pltpu


def _round_up(x, m):
    return ((x + m - 1) // m) * m


def _vmem_budgets():
    """Generation-aware (working-footprint budget, Mosaic vmem limit) in bytes."""
    cap = 64 * 1024 * 1024  # conservative fallback (v7x-sized VMEM)
    try:
        info = pltpu.get_tpu_info()
        cap = int(getattr(info, "vmem_capacity_bytes", cap)) or cap
    except Exception:
        pass
    # 3/8 of VMEM for the double-buffered pipelined blocks, 3/4 as the Mosaic
    # scoped-vmem limit: 48 MiB / 96 MiB on v5e/v6e, 24 MiB / 48 MiB on v7x.
    return (cap * 3) // 8, (cap * 3) // 4


def _pick_tile(c, hw, itemsize, tile, vmem_budget):
    """Largest lane tile (multiple of 128) whose pipelined footprint fits VMEM."""
    hw_pad = _round_up(hw, 128)
    # Double-buffered per-lane VMEM cost, with sublane padding: the (C, blk)
    # logits block pads C up to a multiple of 8 rows; the (1, blk) int32
    # targets block pads to 8 rows.
    per_lane = 2 * (_round_up(c, 8) * itemsize + 8 * 4)
    blk_budget = max(((vmem_budget // per_lane) // 128) * 128, 128)
    blk = max(128, min(_round_up(tile, 128), hw_pad, blk_budget))
    # Prefer a tile that exactly divides HW (drops the tail mask) as long as
    # it costs at most ~2x in grid-step count.
    if hw % blk != 0:
        cand = blk
        while cand >= 128 and cand * 2 >= blk:
            if hw % cand == 0:
                return cand
            cand -= 128
    return blk


def _fold_lanes(part, blk):
    """Sum the blk/128 lane-chunks of a (1, blk) vector into one (1, 128) row.

    Static lane-aligned slices + a balanced add tree: VALU-only, no relayout,
    no cross-lane reduce, no VMEM read-modify-write.
    """
    chunks = [part[:, i * 128:(i + 1) * 128] for i in range(blk // 128)]
    while len(chunks) > 1:
        nxt = [a + b for a, b in zip(chunks[0::2], chunks[1::2])]
        if len(chunks) % 2:
            nxt.append(chunks[-1])
        chunks = nxt
    return chunks[0]


def _ce_kernel(*refs, hw, blk, need_mask, has_weight):
    if has_weight:
        logits_ref, targets_ref, wcls_ref, out_ref = refs
    else:
        logits_ref, targets_ref, out_ref = refs
        wcls_ref = None

    j = pl.program_id(1)

    x = logits_ref[...]          # (C, blk), input dtype (f32 or bf16)
    t = targets_ref[...]         # (1, blk) int32

    if need_mask:
        lane = jax.lax.broadcasted_iota(jnp.int32, (1, blk), 1)
        valid = (j * blk + lane) < hw          # (1, blk) bool; all-true off-tail
        t = jnp.where(valid, t, -1)            # -1 never matches a class

    cls = jax.lax.broadcasted_iota(jnp.int32, x.shape, 0)   # (C, blk)
    onehot = cls == t                                        # (C, blk) bool

    # Exact (comparison/pick) ops stay in the raw dtype; only x-m / exp / log
    # run in f32.
    m = jnp.max(x, axis=0, keepdims=True)                                   # (1, blk)
    tgt = jnp.sum(jnp.where(onehot, x, jnp.zeros([], x.dtype)),
                  axis=0, keepdims=True)                                    # (1, blk)

    m_f = m.astype(jnp.float32)
    s = x.astype(jnp.float32) - m_f                                         # (C, blk) f32
    sumexp = jnp.sum(jnp.exp(s), axis=0, keepdims=True)                     # (1, blk)
    # lse - x[t] = (log(sumexp) + m) - tgt = log(sumexp) - (tgt - m)
    loss_p = jnp.log(sumexp) - (tgt.astype(jnp.float32) - m_f)              # (1, blk)

    if has_weight:
        wb = wcls_ref[...]                                                  # (C, 1) f32
        # Per-pixel weight via the same one-hot; padded lanes (t == -1) get 0.
        w_p = jnp.sum(jnp.where(onehot, wb, 0.0), axis=0, keepdims=True)    # (1, blk)
        wloss = w_p * loss_p
        if need_mask:
            # Guard against NaN/Inf garbage in the padded lanes (0 * NaN = NaN).
            wloss = jnp.where(valid, wloss, 0.0)
        out_ref[...] = jnp.concatenate(
            [_fold_lanes(wloss, blk), _fold_lanes(w_p, blk)], axis=0)       # (2, 128)
    else:
        if need_mask:
            loss_p = jnp.where(valid, loss_p, 0.0)
        out_ref[...] = _fold_lanes(loss_p, blk)                             # (1, 128)


@functools.partial(jax.jit, static_argnames=("tile",))
def cross_entropy_loss_2d(outputs, targets, weight=None, *, tile=32768):
    """outputs: (N, C, H, W) float logits; targets: (N, H, W) int labels;
    weight: optional (C,) per-class weight.  Returns scalar mean loss (f32)."""
    N, C, H, W = outputs.shape
    HW = H * W
    has_weight = weight is not None

    # Free reshapes only -- no transpose / extra HBM pass before the kernel.
    logits = outputs.reshape(N, C, HW)
    t = targets.reshape(N, 1, HW).astype(jnp.int32)

    budget, vmem_limit = _vmem_budgets()
    blk = _pick_tile(C, HW, jnp.dtype(outputs.dtype).itemsize, tile, budget)
    num_tiles = pl.cdiv(HW, blk)
    need_mask = (HW % blk) != 0
    out_rows = 2 if has_weight else 1

    kernel = functools.partial(_ce_kernel, hw=HW, blk=blk,
                               need_mask=need_mask, has_weight=has_weight)

    in_specs = [
        pl.BlockSpec((None, C, blk), lambda n, j: (n, 0, j)),   # logits  -> (C, blk)
        pl.BlockSpec((None, 1, blk), lambda n, j: (n, 0, j)),   # targets -> (1, blk)
    ]
    args = [logits, t]
    if has_weight:
        in_specs.append(pl.BlockSpec((C, 1), lambda n, j: (0, 0)))  # class weights
        args.append(weight.astype(jnp.float32).reshape(C, 1))

    # Every (n, j) grid step writes its own (rows, 128) partial-sum block, so
    # both grid axes are "parallel" (v7x megacore splits either axis) and no
    # cross-step accumulator / init-finalize coupling exists.
    partials = pl.pallas_call(
        kernel,
        out_shape=jax.ShapeDtypeStruct((N, num_tiles, out_rows, 128), jnp.float32),
        grid_spec=pltpu.PrefetchScalarGridSpec(
            num_scalar_prefetch=0,
            grid=(N, num_tiles),
            in_specs=in_specs,
            out_specs=pl.BlockSpec((None, None, out_rows, 128),
                                   lambda n, j: (n, j, 0, 0)),
        ),
        compiler_params=pltpu.CompilerParams(
            dimension_semantics=("parallel", "parallel"),
            vmem_limit_bytes=int(vmem_limit),
        ),
    )(*args)

    loss_sum = jnp.sum(partials[:, :, 0, :])
    if has_weight:
        w_sum = jnp.sum(partials[:, :, 1, :])
    else:
        w_sum = jnp.float32(N * HW)
    return loss_sum / w_sum


def _reference(outputs, targets, weight=None):
    # pure-JAX reference of torch.nn.CrossEntropyLoss(weight), reduction='mean'
    logp = jax.nn.log_softmax(outputs.astype(jnp.float32), axis=1)       # (N,C,H,W)
    t = targets.astype(jnp.int32)
    picked = jnp.take_along_axis(logp, t[:, None, :, :], axis=1)[:, 0]   # (N,H,W)
    if weight is None:
        return jnp.mean(-picked)
    w = weight[t]                                                        # (N,H,W)
    return jnp.sum(-picked * w) / jnp.sum(w)


if __name__ == "__main__":
    key = jax.random.PRNGKey(0)
    k1, k2, k3, k4 = jax.random.split(key, 4)

    N, C, H, W = 2, 4, 16, 16
    outputs = jax.random.normal(k1, (N, C, H, W), dtype=jnp.float32)
    targets = jax.random.randint(k2, (N, H, W), 0, C, dtype=jnp.int32)
    weight = jnp.array([1.0, 2.0, 0.5, 1.5], dtype=jnp.float32)

    # Case 1: weighted, H*W a multiple of the lane tile (no tail mask).
    loss = jax.block_until_ready(cross_entropy_loss_2d(outputs, targets, weight))
    ref = _reference(outputs, targets, weight)
    assert jnp.allclose(loss, ref, rtol=1e-5, atol=1e-5), (loss, ref)

    # Case 2: unweighted path (no per-pixel weight work, static denominator).
    loss2 = jax.block_until_ready(cross_entropy_loss_2d(outputs, targets))
    ref2 = _reference(outputs, targets)
    assert jnp.allclose(loss2, ref2, rtol=1e-5, atol=1e-5), (loss2, ref2)

    # Case 3: ragged spatial size (H*W not a multiple of 128 -> tail-mask path).
    H3, W3 = 10, 10
    outputs3 = jax.random.normal(k3, (N, C, H3, W3), dtype=jnp.float32)
    targets3 = jax.random.randint(k4, (N, H3, W3), 0, C, dtype=jnp.int32)
    loss3 = jax.block_until_ready(cross_entropy_loss_2d(outputs3, targets3, weight))
    ref3 = _reference(outputs3, targets3, weight)
    assert jnp.allclose(loss3, ref3, rtol=1e-5, atol=1e-5), (loss3, ref3)

    print("KERNEL_OK")
</pallas_src>

<mosaic_0001>
module attributes {stable_mosaic.version = 11 : i64} {
  func.func @_ce_kernel(%arg0: i32, %arg1: i32, %arg2: memref<1x4x256xf32, #tpu.memory_space<vmem>>, %arg3: memref<1x1x256xi32, #tpu.memory_space<vmem>>, %arg4: memref<4x1xf32, #tpu.memory_space<vmem>>, %arg5: memref<1x1x2x128xf32, #tpu.memory_space<vmem>>) attributes {dimension_semantics = [#tpu.dimension_semantics<parallel>, #tpu.dimension_semantics<parallel>], iteration_bounds = array<i64: 2, 1>, scalar_prefetch = 0 : i64, scratch_operands = 0 : i64, tpu.core_type = #tpu.core_type<tc>, window_params = [{transform_indices = @transform_0, window_bounds = array<i64: 1, 4, 256>}, {transform_indices = @transform_1, window_bounds = array<i64: 1, 1, 256>}, {pipeline_mode = #tpu.pipeline_mode<synchronous>, transform_indices = @transform_2, window_bounds = array<i64: 4, 1>}, {transform_indices = @transform_3, window_bounds = array<i64: 1, 1, 2, 128>}]} {
    %c0 = arith.constant 0 : index
    %c0_0 = arith.constant 0 : index
    %c0_1 = arith.constant 0 : index
    %0 = vector.load %arg2[%c0, %c0_0, %c0_1] : memref<1x4x256xf32, #tpu.memory_space<vmem>>, vector<1x4x256xf32>
    %1 = vector.shape_cast %0 : vector<1x4x256xf32> to vector<4x256xf32>
    %c0_2 = arith.constant 0 : index
    %c0_3 = arith.constant 0 : index
    %c0_4 = arith.constant 0 : index
    %2 = vector.load %arg3[%c0_2, %c0_3, %c0_4] : memref<1x1x256xi32, #tpu.memory_space<vmem>>, vector<1x1x256xi32>
    %3 = vector.shape_cast %2 : vector<1x1x256xi32> to vector<1x256xi32>
    %4 = tpu.iota {dimensions = array<i32: 0>} : vector<4x256xi32>
    %5 = vector.broadcast %3 : vector<1x256xi32> to vector<4x256xi32>
    %6 = arith.cmpi eq, %4, %5 : vector<4x256xi32>
    %cst = arith.constant dense<0xFF800000> : vector<256xf32>
    %7 = vector.multi_reduction <maximumf>, %1, %cst [0] : vector<4x256xf32> to vector<256xf32>
    %8 = vector.shape_cast %7 : vector<256xf32> to vector<1x256xf32>
    %cst_5 = arith.constant 0.000000e+00 : f32
    %9 = vector.broadcast %cst_5 : f32 to vector<4x256xf32>
    %10 = arith.select %6, %1, %9 : vector<4x256xi1>, vector<4x256xf32>
    %cst_6 = arith.constant dense<0.000000e+00> : vector<256xf32>
    %11 = vector.multi_reduction <add>, %10, %cst_6 [0] : vector<4x256xf32> to vector<256xf32>
    %12 = vector.shape_cast %11 : vector<256xf32> to vector<1x256xf32>
    %13 = vector.broadcast %8 : vector<1x256xf32> to vector<4x256xf32>
    %14 = arith.subf %1, %13 : vector<4x256xf32>
    %15 = math.exp %14 : vector<4x256xf32>
    %cst_7 = arith.constant dense<0.000000e+00> : vector<256xf32>
    %16 = vector.multi_reduction <add>, %15, %cst_7 [0] : vector<4x256xf32> to vector<256xf32>
    %17 = vector.shape_cast %16 : vector<256xf32> to vector<1x256xf32>
    %18 = math.log %17 : vector<1x256xf32>
    %19 = arith.subf %12, %8 : vector<1x256xf32>
    %20 = arith.subf %18, %19 : vector<1x256xf32>
    %c0_8 = arith.constant 0 : index
    %c0_9 = arith.constant 0 : index
    %21 = vector.load %arg4[%c0_8, %c0_9] : memref<4x1xf32, #tpu.memory_space<vmem>>, vector<4x1xf32>
    %cst_10 = arith.constant 0.000000e+00 : f32
    %22 = vector.shape_cast %21 : vector<4x1xf32> to vector<4x1xf32>
    %23 = vector.broadcast %22 : vector<4x1xf32> to vector<4x256xf32>
    %24 = vector.broadcast %cst_10 : f32 to vector<4x256xf32>
    %25 = arith.select %6, %23, %24 : vector<4x256xi1>, vector<4x256xf32>
    %cst_11 = arith.constant dense<0.000000e+00> : vector<256xf32>
    %26 = vector.multi_reduction <add>, %25, %cst_11 [0] : vector<4x256xf32> to vector<256xf32>
    %27 = vector.shape_cast %26 : vector<256xf32> to vector<1x256xf32>
    %28 = arith.mulf %27, %20 : vector<1x256xf32>
    %29 = vector.extract_strided_slice %28 {offsets = [0, 0], sizes = [1, 128], strides = [1, 1]} : vector<1x256xf32> to vector<1x128xf32>
    %30 = vector.extract_strided_slice %28 {offsets = [0, 128], sizes = [1, 128], strides = [1, 1]} : vector<1x256xf32> to vector<1x128xf32>
    %31 = arith.addf %29, %30 : vector<1x128xf32>
    %32 = vector.extract_strided_slice %27 {offsets = [0, 0], sizes = [1, 128], strides = [1, 1]} : vector<1x256xf32> to vector<1x128xf32>
    %33 = vector.extract_strided_slice %27 {offsets = [0, 128], sizes = [1, 128], strides = [1, 1]} : vector<1x256xf32> to vector<1x128xf32>
    %34 = arith.addf %32, %33 : vector<1x128xf32>
    %35 = tpu.concatenate %31, %34 in 0 : vector<1x128xf32>, vector<1x128xf32> -> vector<2x128xf32>
    %c0_12 = arith.constant 0 : index
    %c0_13 = arith.constant 0 : index
    %c0_14 = arith.constant 0 : index
    %c0_15 = arith.constant 0 : index
    %36 = vector.load %arg5[%c0_12, %c0_13, %c0_14, %c0_15] : memref<1x1x2x128xf32, #tpu.memory_space<vmem>>, vector<1x1x2x128xf32>
    %37 = vector.shape_cast %36 : vector<1x1x2x128xf32> to vector<2x128xf32>
    %38 = vector.shape_cast %35 : vector<2x128xf32> to vector<1x1x2x128xf32>
    tpu.vector_store %arg5[%c0_12, %c0_13, %c0_14, %c0_15], %38 {strides = array<i32>} : memref<1x1x2x128xf32, #tpu.memory_space<vmem>>, vector<1x1x2x128xf32>,
    return
  }
  func.func @transform_0(%arg0: i32, %arg1: i32) -> (i32, i32, i32) {
    %c0_i32 = arith.constant 0 : i32
    %c0_i32_0 = arith.constant 0 : i32
    return %arg0, %c0_i32, %arg1 : i32, i32, i32
  }
  func.func @transform_1(%arg0: i32, %arg1: i32) -> (i32, i32, i32) {
    %c0_i32 = arith.constant 0 : i32
    %c0_i32_0 = arith.constant 0 : i32
    return %arg0, %c0_i32, %arg1 : i32, i32, i32
  }
  func.func @transform_2(%arg0: i32, %arg1: i32) -> (i32, i32) {
    %c0_i32 = arith.constant 0 : i32
    %c0_i32_0 = arith.constant 0 : i32
    %c0_i32_1 = arith.constant 0 : i32
    return %c0_i32, %c0_i32_0 : i32, i32
  }
  func.func @transform_3(%arg0: i32, %arg1: i32) -> (i32, i32, i32, i32) {
    %c0_i32 = arith.constant 0 : i32
    %c0_i32_0 = arith.constant 0 : i32
    %c0_i32_1 = arith.constant 0 : i32
    return %arg0, %arg1, %c0_i32, %c0_i32_0 : i32, i32, i32, i32
  }
}

</mosaic_0001>

<llo_original>
// kernel: cross_entropy_loss_2d.1
$region0: #{cross_entropy_loss_2d.1}
  #allocation0 [shape = 'u32[]', space=smem, size = 0x4, offset = 0x4, fixed_abs, tag = 'smem constant byte address 0x4 - core index']
  #allocation1 [shape = 'u32[144,128]{1,0:T(1,128)}', space=vmem, size = 0x12000, scoped, tag = 'internal scratch']
  %s0 = inlined_call_operand.vmem [shape: f32[2,4,256], index: 0, kind: input, shape index: {}]
  %s1 = inlined_call_operand.vmem [shape: s32[2,1,256], index: 1, kind: input, shape index: {}]
  %s2 = inlined_call_operand.vmem [shape: f32[4,1], index: 2, kind: input, shape index: {}]
  %s3 = inlined_call_operand.vmem [shape: f32[2,1,2,128], index: 3, kind: output, shape index: {}]
  %s4 = sld [smem:[#allocation0]]
  $region45: #{cross_entropy_loss_2d.1} parent=0
    _
  %s6 = ssub.s32 1, %s4
  %s7 = scalar_select 0, %s6, %s4
  loop: start=0, step=1, limit=4
  $region2: #{cross_entropy_loss_2d.1} parent=0 // loop_pre_header
    _
  $region3: #{cross_entropy_loss_2d.1} parent=0 // loop_header
    %s9 = sphi 0, %s13
    %p10 = scmp.ge.s32.totalorder %s9, 4
    %s16 = sphi 0, %s28
    %s17 = sphi 0, %s24
    %s18 = sphi 0, %s16
    %s19 = sphi 0, %s17
    %s20 = sphi 0, %s18
    %s21 = sphi 0, %s19
    %s33 = sphi 0, %s35
    %s36 = sphi 0, %s33
    %s37 = sphi 0, %s36
    %s53 = sphi 0, %s37
    %s61 = sphi 0, %s63
    %s64 = sphi 0, %s61
    %s65 = sphi 0, %s64
    %s81 = sphi 0, %s65
    %s85 = sphi 0, %s85
    %s87 = sphi 0, %s85
    %s88 = sphi 0, %s87
    %s102 = sphi 0, %s88
    %s110 = sphi 0, %s112
    %s113 = sphi 0, %s110
    %s114 = sphi 0, %s113
    %s130 = sphi 0, %s114
  $region4: #{cross_entropy_loss_2d.1} parent=0 // loop_header_branch
    %12 = sbr.rel (%p10) target = $region8
  $region5: #{cross_entropy_loss_2d.1} parent=0 // loop_body
    %s14 = ssub.s32 %s9, 1
    %s15 = ssub.s32 %s9, 2
    %s22 = sadd.s32 1, %s17
    %p23 = scmp.ge.s32.totalorder %s22, 1
    %s24 = scalar_select %p23, 0, %s22
    %s25 = sadd.s32 1, %s16
    %s26 = scalar_select %p23, %s25, %s16
    %p27 = scmp.ge.s32.totalorder %s26, 2
    %s28 = scalar_select %p27, 0, %s26
    %s29 = ssub.s32 %s16, %s28
    %s30 = ssub.s32 %s17, %s24
    %s31 = sor.u32 %s29, %s30
    %p32 = scmp.eq.s32.totalorder %s31, 0
    %s34 = sadd.s32 %s33, 1
    %s35 = scalar_select %p32, %s33, %s34
    %p38 = pneg %p32
    %p39 = scmp.eq.s32.totalorder %s9, 1
    %p40 = por %p38, %p39
    %p41 = scmp.ne.s32.totalorder %s33, %s36
    %p42 = scmp.eq.s32.totalorder %s9, 0
    %p43 = por %p41, %p42
    %p44 = scmp.ne.s32.totalorder %s33, %s36
    %p45 = scmp.eq.s32.totalorder %s14, 1
    %p46 = por %p44, %p45
    %p47 = scmp.ne.s32.totalorder %s36, %s37
    %p48 = scmp.eq.s32.totalorder %s14, 0
    %p49 = por %p47, %p48
    %p50 = scmp.ne.s32.totalorder %s36, %s37
    %p51 = scmp.eq.s32.totalorder %s15, 1
    %p52 = por %p50, %p51
    %p54 = scmp.ne.s32.totalorder %s37, %s53
    %p55 = scmp.eq.s32.totalorder %s15, 0
    %p56 = por %p54, %p55
    %s57 = ssub.s32 %s16, %s28
    %s58 = ssub.s32 %s17, %s24
    %s59 = sor.u32 %s57, %s58
    %p60 = scmp.eq.s32.totalorder %s59, 0
    %s62 = sadd.s32 %s61, 1
    %s63 = scalar_select %p60, %s61, %s62
    %p66 = pneg %p60
    %p67 = scmp.eq.s32.totalorder %s9, 1
    %p68 = por %p66, %p67
    %p69 = scmp.ne.s32.totalorder %s61, %s64
    %p70 = scmp.eq.s32.totalorder %s9, 0
    %p71 = por %p69, %p70
    %p72 = scmp.ne.s32.totalorder %s61, %s64
    %p73 = scmp.eq.s32.totalorder %s14, 1
    %p74 = por %p72, %p73
    %p75 = scmp.ne.s32.totalorder %s64, %s65
    %p76 = scmp.eq.s32.totalorder %s14, 0
    %p77 = por %p75, %p76
    %p78 = scmp.ne.s32.totalorder %s64, %s65
    %p79 = scmp.eq.s32.totalorder %s15, 1
    %p80 = por %p78, %p79
    %p82 = scmp.ne.s32.totalorder %s65, %s81
    %p83 = scmp.eq.s32.totalorder %s15, 0
    %p84 = por %p82, %p83
    %s86 = sadd.s32 %s85, 1
    %p89 = scmp.eq.s32.totalorder %s9, 1
    %p90 = scmp.ne.s32.totalorder %s85, %s87
    %p91 = scmp.eq.s32.totalorder %s9, 0
    %p92 = por %p90, %p91
    %p93 = scmp.ne.s32.totalorder %s85, %s87
    %p94 = scmp.eq.s32.totalorder %s14, 1
    %p95 = por %p93, %p94
    %p96 = scmp.ne.s32.totalorder %s87, %s88
    %p97 = scmp.eq.s32.totalorder %s14, 0
    %p98 = por %p96, %p97
    %p99 = scmp.ne.s32.totalorder %s87, %s88
    %p100 = scmp.eq.s32.totalorder %s15, 1
    %p101 = por %p99, %p100
    %p103 = scmp.ne.s32.totalorder %s88, %s102
    %p104 = scmp.eq.s32.totalorder %s15, 0
    %p105 = por %p103, %p104
    %s106 = ssub.s32 %s16, %s28
    %s107 = ssub.s32 %s17, %s24
    %s108 = sor.u32 %s106, %s107
    %p109 = scmp.eq.s32.totalorder %s108, 0
    %s111 = sadd.s32 %s110, 1
    %s112 = scalar_select %p109, %s110, %s111
    %p115 = pneg %p109
    %p116 = scmp.eq.s32.totalorder %s9, 1
    %p117 = por %p115, %p116
    %p118 = scmp.ne.s32.totalorder %s110, %s113
    %p119 = scmp.eq.s32.totalorder %s9, 0
    %p120 = por %p118, %p119
    %p121 = scmp.ne.s32.totalorder %s110, %s113
    %p122 = scmp.eq.s32.totalorder %s14, 1
    %p123 = por %p121, %p122
    %p124 = scmp.ne.s32.totalorder %s113, %s114
    %p125 = scmp.eq.s32.totalorder %s14, 0
    %p126 = por %p124, %p125
    %p127 = scmp.ne.s32.totalorder %s113, %s114
    %p128 = scmp.eq.s32.totalorder %s15, 1
    %p129 = por %p127, %p128
    %p131 = scmp.ne.s32.totalorder %s114, %s130
    %p132 = scmp.eq.s32.totalorder %s15, 0
    %p133 = por %p131, %p132
    %p134 = scmp.le.s32.totalorder 1, %s9
    %p135 = scmp.lt.s32.totalorder %s9, 3
    %p136 = pnand %p134, %p135
    %p137 = pneg %p136
    // Predicated region
    $region9: #{cross_entropy_loss_2d.1} parent=5 // pred_check
      _
    $region10: #{cross_entropy_loss_2d.1} parent=5 // pred_check_branch
      %139 = sbr.rel (%p136) target = $region12
    $region11: #{cross_entropy_loss_2d.1} parent=5 // pred_region
      %s140 = ssub.s32 %s9, 1
      // Predicated region
      $region13: #{cross_entropy_loss_2d.1} parent=11 // pred_check
        %p141 = pneg %p98
      $region14: #{cross_entropy_loss_2d.1} parent=11 // pred_check_branch
        %143 = sbr.rel (%p141) target = $region16
      $region15: #{cross_entropy_loss_2d.1} parent=11 // pred_region
        _
      $region16: #{cross_entropy_loss_2d.1} parent=11 // pred_fallthru
        _
    $region12: #{cross_entropy_loss_2d.1} parent=5 // pred_fallthru
      _
    %p144 = scmp.lt.s32.totalorder %s9, 2
    // Predicated region
    $region17: #{cross_entropy_loss_2d.1} parent=5 // pred_check
      %p145 = pneg %p144
    $region18: #{cross_entropy_loss_2d.1} parent=5 // pred_check_branch
      %147 = sbr.rel (%p145) target = $region20
    $region19: #{cross_entropy_loss_2d.1} parent=5 // pred_region
      // Predicated region
      $region21: #{cross_entropy_loss_2d.1} parent=19 // pred_check
        %p148 = pneg %p43
      $region22: #{cross_entropy_loss_2d.1} parent=19 // pred_check_branch
        %150 = sbr.rel (%p148) target = $region24
      $region23: #{cross_entropy_loss_2d.1} parent=19 // pred_region
        %s151 = smul.u32 2, %s17
        %p152 = scmp.lt.s32.totalorder %s16, 1
        %s153 = scalar_select %p152, %s16, 1
        %p154 = scmp.lt.s32.totalorder %s151, 1
        %s155 = scalar_select %p154, %s151, 1
        %s156 = smul.addr %s153, 2
        %s157 = sadd.s32 %s155, %s156
        %s158 = smul.addr %s157, 4
        %s159 = scalar_lea.vmem %s0, %s158
        %s160 = smul.u32 2, %s17
      $region24: #{cross_entropy_loss_2d.1} parent=19 // pred_fallthru
        _
      // Predicated region
      $region25: #{cross_entropy_loss_2d.1} parent=19 // pred_check
        %p161 = pneg %p71
      $region26: #{cross_entropy_loss_2d.1} parent=19 // pred_check_branch
        %163 = sbr.rel (%p161) target = $region28
      $region27: #{cross_entropy_loss_2d.1} parent=19 // pred_region
        %s164 = smul.u32 2, %s17
        %p165 = scmp.lt.s32.totalorder %s16, 1
        %s166 = scalar_select %p165, %s16, 1
        %p167 = scmp.lt.s32.totalorder %s164, 1
        %s168 = scalar_select %p167, %s164, 1
        %s169 = smul.addr %s166, 2
        %s170 = sadd.s32 %s168, %s169
        %s171 = scalar_lea.vmem %s1, %s170
        %s172 = smul.u32 2, %s17
      $region28: #{cross_entropy_loss_2d.1} parent=19 // pred_fallthru
        _
    $region20: #{cross_entropy_loss_2d.1} parent=5 // pred_fallthru
      _
    %p173 = scmp.le.s32.totalorder 1, %s9
    %p174 = scmp.lt.s32.totalorder %s9, 3
    %p175 = pnand %p173, %p174
    %p176 = pneg %p175
    // Predicated region
    $region29: #{cross_entropy_loss_2d.1} parent=5 // pred_check
      _
    $region30: #{cross_entropy_loss_2d.1} parent=5 // pred_check_branch
      %178 = sbr.rel (%p175) target = $region32
    $region31: #{cross_entropy_loss_2d.1} parent=5 // pred_region
      %s179 = ssub.s32 %s9, 1
      %s180 = smul.u32 2, %s19
      %p181 = scmp.lt.s32.totalorder %s18, 1
      %s182 = scalar_select %p181, %s18, 1
      %p183 = scmp.lt.s32.totalorder %s180, 1
      %s184 = scalar_select %p183, %s180, 1
      %s185 = smul.addr %s182, 2
      %s186 = sadd.s32 %s184, %s185
      %s187 = smul.addr %s186, 4
      %s188 = scalar_lea.vmem %s0, %s187
      %p189 = pneg %p49
      %p190 = pneg %p46
      %s191 = smul.u32 2, %s19
      %p192 = scmp.lt.s32.totalorder %s18, 1
      %s193 = scalar_select %p192, %s18, 1
      %p194 = scmp.lt.s32.totalorder %s191, 1
      %s195 = scalar_select %p194, %s191, 1
      %s196 = smul.addr %s193, 2
      %s197 = sadd.s32 %s195, %s196
      %s198 = scalar_lea.vmem %s1, %s197
      %p199 = pneg %p77
      %p200 = pneg %p74
      %p201 = pneg %p98
      %p202 = pneg %p95
      %p203 = pneg %p126
      %p204 = pneg %p123
      %p205 = scmp.lt.s32.totalorder %s18, 1
      %s206 = scalar_select %p205, %s18, 1
      %p207 = scmp.lt.s32.totalorder %s19, 0
      %s208 = scalar_select %p207, %s19, 0
      %s209 = sadd.s32 %s208, %s206
      %s210 = smul.addr %s209, 2
      %s211 = scalar_lea.vmem %s3, %s210
      %s212 = smul.u32 2, %s19
      %p213 = scmp.lt.s32.totalorder %s18, 1
      %s214 = scalar_select %p213, %s18, 1
      %p215 = scmp.lt.s32.totalorder %s212, 1
      %s216 = scalar_select %p215, %s212, 1
      %s217 = smul.addr %s214, 2
      %s218 = sadd.s32 %s216, %s217
      %s219 = smul.addr %s218, 4
      %s220 = scalar_lea.vmem %s0, %s219
      %s221 = smul.u32 2, %s19
      %s222 = smul.u32 2, %s19
      %p223 = scmp.lt.s32.totalorder %s18, 1
      %s224 = scalar_select %p223, %s18, 1
      %p225 = scmp.lt.s32.totalorder %s222, 1
      %s226 = scalar_select %p225, %s222, 1
      %s227 = smul.addr %s224, 2
      %s228 = sadd.s32 %s226, %s227
      %s229 = scalar_lea.vmem %s1, %s228
      %s230 = smul.u32 2, %s19
      %p231 = scmp.lt.s32.totalorder %s18, 1
      %s232 = scalar_select %p231, %s18, 1
      %p233 = scmp.lt.s32.totalorder %s19, 0
      %s234 = scalar_select %p233, %s19, 0
      %s235 = sadd.s32 %s234, %s232
      %s236 = smul.addr %s235, 2
      %s237 = scalar_lea.vmem %s3, %s236
      %v238 = vld [vmem:[%s220] sm:$0xff]
      %v239 = vld [vmem:[%s229] sm:$0x3]
      %v240 = vlaneseq
      %v241 = vshrl.u32 %v240, 7
      %v242 = vlaneseq
      %v243 = vshrl.u32 %v242, 7
      %v244 = vsub.s32 0, %v243
      %v245 = vrot.slane %v239, %v244
      %v246 = vlaneseq
      %v247 = vshrl.u32 %v246, 7
      %v248 = vsub.s32 1, %v247
      %v249 = vrot.slane %v239, %v248
      %vm250 = vcmp.eq.s32.totalorder %v241, %v245
      %vm251 = vcmp.eq.s32.totalorder %v241, %v249
      %v253 = vcombine.high %v238, %v238
      %vm255 = vcmask 1043456
      %v256 = vsel %vm255, %v238, -inf
      %v257 = vrot.slane %v256, 4
      %v258 = vmax.f32 %v256, %v257
      %v259 = vrot.slane %v258, 2
      %v260 = vmax.f32 %v258, %v259
      %v261 = vrot.slane %v260, 1
      %v262 = vmax.f32 %v260, %v261
      %v263 = vsel %vm255, %v253, -inf
      %v264 = vrot.slane %v263, 4
      %v265 = vmax.f32 %v263, %v264
      %v266 = vrot.slane %v265, 2
      %v267 = vmax.f32 %v265, %v266
      %v268 = vrot.slane %v267, 1
      %v269 = vmax.f32 %v267, %v268
      %v270 = vsel %vm250, %v238, 0.0
      %v271 = vsel %vm251, %v253, 0.0
      %v272 = vsel %vm255, %v270, 0.0
      %v273 = vrot.slane %v272, 4
      %v274 = vadd.f32 %v272, %v273
      %v275 = vrot.slane %v274, 2
      %v276 = vadd.f32 %v274, %v275
      %v277 = vrot.slane %v276, 1
      %v278 = vadd.f32 %v276, %v277
      %v279 = vsel %vm255, %v271, 0.0
      %v280 = vrot.slane %v279, 4
      %v281 = vadd.f32 %v279, %v280
      %v282 = vrot.slane %v281, 2
      %v283 = vadd.f32 %v281, %v282
      %v284 = vrot.slane %v283, 1
      %v285 = vadd.f32 %v283, %v284
      %v288 = vcombine.low %v262, %v269
      %v290 = vsub.f32 %v238, %v288
      %v291 = vmul.f32 %v290, 1.442695
      %v292 = vpow.pop %v291
      %v294 = vcombine.high %v292, %v292
      %v296 = vsel %vm255, %v292, 0.0
      %v297 = vrot.slane %v296, 4
      %v298 = vadd.f32 %v296, %v297
      %v299 = vrot.slane %v298, 2
      %v300 = vadd.f32 %v298, %v299
      %v301 = vrot.slane %v300, 1
      %v302 = vadd.f32 %v300, %v301
      %v303 = vsel %vm255, %v294, 0.0
      %v304 = vrot.slane %v303, 4
      %v305 = vadd.f32 %v303, %v304
      %v306 = vrot.slane %v305, 2
      %v307 = vadd.f32 %v305, %v306
      %v308 = vrot.slane %v307, 1
      %v309 = vadd.f32 %v307, %v308
      %v310 = vlog2.pop %v302
      %v311 = vmul.f32 %v310, 0.6931472
      %v312 = vlog2.pop %v309
      %v313 = vmul.f32 %v312, 0.6931472
      %v314 = vsub.f32 %v278, %v262
      %v315 = vsub.f32 %v285, %v269
      %v316 = vsub.f32 %v311, %v314
      %v317 = vsub.f32 %v313, %v315
      %v318 = vld [vmem:[%s2] sm:$0xf]
      %320 = vset.pattern.permute.xlu0 0
      %321 = vperm.xlu0 %320, %v318
      %v322 = vpop.permute.xlu0 %321
      %v324 = vsel %vm250, %v322, 0.0
      %v325 = vsel %vm251, %v322, 0.0
      %v326 = vsel %vm255, %v324, 0.0
      %v327 = vrot.slane %v326, 4
      %v328 = vadd.f32 %v326, %v327
      %v329 = vrot.slane %v328, 2
      %v330 = vadd.f32 %v328, %v329
      %v331 = vrot.slane %v330, 1
      %v332 = vadd.f32 %v330, %v331
      %v333 = vsel %vm255, %v325, 0.0
      %v334 = vrot.slane %v333, 4
      %v335 = vadd.f32 %v333, %v334
      %v336 = vrot.slane %v335, 2
      %v337 = vadd.f32 %v335, %v336
      %v338 = vrot.slane %v337, 1
      %v339 = vadd.f32 %v337, %v338
      %v340 = vmul.f32 %v332, %v316
      %v341 = vmul.f32 %v339, %v317
      %v342 = vadd.f32 %v340, %v341
      %v343 = vadd.f32 %v332, %v339
      %vm344 = vcmask 1040384
      %v345 = vsel %vm344, %v342, %v343
      %346 = vst [vmem:[%s237] sm:$0x3] %v345
      %p347 = scmp.lt.s32.totalorder %s18, 1
      %s348 = scalar_select %p347, %s18, 1
      %p349 = scmp.lt.s32.totalorder %s19, 0
      %s350 = scalar_select %p349, %s19, 0
      %s351 = sadd.s32 %s350, %s348
      %s352 = smul.addr %s351, 2
      %s353 = scalar_lea.vmem %s3, %s352
      // Predicated region
      $region33: #{cross_entropy_loss_2d.1} parent=31 // pred_check
        %p354 = pneg %p123
      $region34: #{cross_entropy_loss_2d.1} parent=31 // pred_check_branch
        %356 = sbr.rel (%p354) target = $region36
      $region35: #{cross_entropy_loss_2d.1} parent=31 // pred_region
        _
      $region36: #{cross_entropy_loss_2d.1} parent=31 // pred_fallthru
        _
    $region32: #{cross_entropy_loss_2d.1} parent=5 // pred_fallthru
      _
    %p357 = scmp.le.s32.totalorder 2, %s9
    // Predicated region
    $region37: #{cross_entropy_loss_2d.1} parent=5 // pred_check
      %p358 = pneg %p357
    $region38: #{cross_entropy_loss_2d.1} parent=5 // pred_check_branch
      %360 = sbr.rel (%p358) target = $region40
    $region39: #{cross_entropy_loss_2d.1} parent=5 // pred_region
      %s361 = ssub.s32 %s9, 2
      // Predicated region
      $region41: #{cross_entropy_loss_2d.1} parent=39 // pred_check
        %p362 = pneg %p129
      $region42: #{cross_entropy_loss_2d.1} parent=39 // pred_check_branch
        %364 = sbr.rel (%p362) target = $region44
      $region43: #{cross_entropy_loss_2d.1} parent=39 // pred_region
        %p365 = scmp.lt.s32.totalorder %s20, 1
        %s366 = scalar_select %p365, %s20, 1
        %p367 = scmp.lt.s32.totalorder %s21, 0
        %s368 = scalar_select %p367, %s21, 0
        %s369 = sadd.s32 %s368, %s366
        %s370 = smul.addr %s369, 2
        %s371 = scalar_lea.vmem %s3, %s370
      $region44: #{cross_entropy_loss_2d.1} parent=39 // pred_fallthru
        _
    $region40: #{cross_entropy_loss_2d.1} parent=5 // pred_fallthru
      _
  $region6: #{cross_entropy_loss_2d.1} parent=0 // loop_footer
    %s13 = sadd.s32 1, %s9
  $region7: #{cross_entropy_loss_2d.1} parent=0 // loop_footer_branch
    %8 = sbr.rel target = $region3
  $region8: #{cross_entropy_loss_2d.1} parent=0 // loop_exit
    _

</llo_original>
